<compile_context>
chip_gen: v7x
topology: tpu7x:2x2x1
jax: 0.10.0
libtpu: 0.0.40
codegen_flags: <defaults>
</compile_context>

<pallas_src>
import math
import jax
import jax.numpy as jnp
from jax.experimental import pallas as pl
from jax.experimental.pallas import tpu as pltpu


def _round_up(n, m):
    return ((n + m - 1) // m) * m


def _cdiv(a, b):
    return (a + b - 1) // b


def _mlp_kernel(x_ref, w1_ref, b1_ref, w2_ref, b2_ref, w3_ref, b3_ref, out_ref):
    # In-kernel f32 -> bf16 cast (avoids a separate XLA pad/cast pass in HBM).
    x = x_ref[...].astype(jnp.bfloat16)                                # (tb, F)

    # fc1 + bias + ReLU (MXU bf16 matmul, f32 accumulation, f32 elementwise)
    h1 = jnp.dot(x, w1_ref[...], preferred_element_type=jnp.float32) + b1_ref[...]
    h1 = jnp.maximum(h1, 0.0)

    # dropout1(p=0.2): identity at inference time (eval mode) — no-op.
    # TODO(synk): training-mode dropout (pltpu.prng_*) not implemented.

    # fc2 + bias + ReLU
    h2 = jnp.dot(h1.astype(jnp.bfloat16), w2_ref[...],
                 preferred_element_type=jnp.float32) + b2_ref[...]
    h2 = jnp.maximum(h2, 0.0)

    # fc3 -> logits, stored narrow (num_classes lanes) in f32.
    logits = jnp.dot(h2.astype(jnp.bfloat16), w3_ref[...],
                     preferred_element_type=jnp.float32) + b3_ref[...]
    out_ref[...] = logits.astype(out_ref.dtype)


def prepare_params(p):
    """Weights -> bf16 (MXU operands, VMEM-resident), biases -> (1, N) f32. No padding."""
    return {
        "w1": p["w1"].astype(jnp.bfloat16), "b1": p["b1"].reshape(1, -1).astype(jnp.float32),
        "w2": p["w2"].astype(jnp.bfloat16), "b2": p["b2"].reshape(1, -1).astype(jnp.float32),
        "w3": p["w3"].astype(jnp.bfloat16), "b3": p["b3"].reshape(1, -1).astype(jnp.float32),
    }


def _choose_batch_tile(B, batch_tile):
    # Aim for >= 4 grid steps (DMA/compute overlap; both v7x TCs busy), tiles a
    # multiple of 16 rows (bf16 sublane packing), capped at `batch_tile` for
    # huge batches, and never rounded up past the (8-rounded) batch itself.
    tb = _round_up(_cdiv(B, 4), 16)
    tb = min(tb, _round_up(batch_tile, 16))
    tb = min(tb, _round_up(B, 8))
    return max(tb, 8)


def gesture_classifier_forward(x, prepared, *, batch_tile=1024):
    """x: (B, input_size) f32. prepared: output of prepare_params.
    Returns (B, num_classes) f32 logits."""
    B, F = x.shape
    num_classes = prepared["w3"].shape[1]

    tb = _choose_batch_tile(B, batch_tile)
    grid = (_cdiv(B, tb),)

    const2d = lambda a: pl.BlockSpec(a.shape, lambda i: (0, 0))  # VMEM-resident across grid

    return pl.pallas_call(
        _mlp_kernel,
        out_shape=jax.ShapeDtypeStruct((B, num_classes), jnp.float32),
        grid=grid,
        in_specs=[
            pl.BlockSpec((tb, F), lambda i: (i, 0)),   # raw f32 input; last dim == full dim
            const2d(prepared["w1"]), const2d(prepared["b1"]),
            const2d(prepared["w2"]), const2d(prepared["b2"]),
            const2d(prepared["w3"]), const2d(prepared["b3"]),
        ],
        out_specs=pl.BlockSpec((tb, num_classes), lambda i: (i, 0)),
        compiler_params=pltpu.CompilerParams(
            dimension_semantics=("parallel",),  # megacore sharding on v7x; harmless elsewhere
        ),
    )(x, prepared["w1"], prepared["b1"], prepared["w2"], prepared["b2"],
      prepared["w3"], prepared["b3"])


def init_params(key, input_size, num_classes):
    """Deterministic init mimicking PyTorch nn.Linear default (U(-1/sqrt(fan_in), +)).
    Weights stored (in_features, out_features), i.e. transposed vs. PyTorch, so y = x @ W + b."""
    def linear(key, fan_in, fan_out):
        kw, kb = jax.random.split(key)
        bound = 1.0 / math.sqrt(fan_in)
        w = jax.random.uniform(kw, (fan_in, fan_out), jnp.float32, -bound, bound)
        b = jax.random.uniform(kb, (1, fan_out), jnp.float32, -bound, bound)
        return w, b

    k1, k2, k3 = jax.random.split(key, 3)
    w1, b1 = linear(k1, input_size, 128)
    w2, b2 = linear(k2, 128, 64)
    w3, b3 = linear(k3, 64, num_classes)
    return {"w1": w1, "b1": b1, "w2": w2, "b2": b2, "w3": w3, "b3": b3}


def reference_forward_bf16(x, p):
    """JAX reference using the same bf16-weight / f32-accumulate recipe as the kernel."""
    w1 = p["w1"].astype(jnp.bfloat16)
    w2 = p["w2"].astype(jnp.bfloat16)
    w3 = p["w3"].astype(jnp.bfloat16)
    h = jnp.dot(x.astype(jnp.bfloat16), w1, preferred_element_type=jnp.float32) + p["b1"]
    h = jnp.maximum(h, 0.0)
    h = jnp.dot(h.astype(jnp.bfloat16), w2, preferred_element_type=jnp.float32) + p["b2"]
    h = jnp.maximum(h, 0.0)
    return jnp.dot(h.astype(jnp.bfloat16), w3, preferred_element_type=jnp.float32) + p["b3"]


if __name__ == "__main__":
    # 21 hand landmarks * 3 coords = 63 features.
    input_size = 63
    num_classes = 10

    key = jax.random.PRNGKey(0)
    kx, kp, kx2 = jax.random.split(key, 3)
    params = init_params(kp, input_size, num_classes)
    prepared = prepare_params(params)

    # Case 1: tiny batch (single grid step, block == array).
    x = jax.random.normal(kx, (8, input_size), dtype=jnp.float32)
    logits = jax.block_until_ready(gesture_classifier_forward(x, prepared))
    ref = reference_forward_bf16(x, params)
    assert logits.shape == (8, num_classes)
    assert jnp.allclose(logits, ref, atol=2e-3, rtol=2e-3)

    # Case 2: non-multiple batch, multi-step grid (exercises tiling + partial last block).
    x2 = jax.random.normal(kx2, (260, input_size), dtype=jnp.float32)
    logits2 = jax.block_until_ready(gesture_classifier_forward(x2, prepared))
    ref2 = reference_forward_bf16(x2, params)
    assert logits2.shape == (260, num_classes)
    assert jnp.allclose(logits2, ref2, atol=2e-3, rtol=2e-3)

    print("KERNEL_OK")
</pallas_src>

<mosaic_0001>
module attributes {stable_mosaic.version = 11 : i64} {
  func.func @_mlp_kernel(%arg0: i32, %arg1: memref<8x63xf32, #tpu.memory_space<vmem>>, %arg2: memref<63x128xbf16, #tpu.memory_space<vmem>>, %arg3: memref<1x128xf32, #tpu.memory_space<vmem>>, %arg4: memref<128x64xbf16, #tpu.memory_space<vmem>>, %arg5: memref<1x64xf32, #tpu.memory_space<vmem>>, %arg6: memref<64x10xbf16, #tpu.memory_space<vmem>>, %arg7: memref<1x10xf32, #tpu.memory_space<vmem>>, %arg8: memref<8x10xf32, #tpu.memory_space<vmem>>) attributes {dimension_semantics = [#tpu.dimension_semantics<parallel>], iteration_bounds = array<i64: 1>, scalar_prefetch = 0 : i64, scratch_operands = 0 : i64, tpu.core_type = #tpu.core_type<tc>, window_params = [{transform_indices = @transform_0, window_bounds = array<i64: 8, 63>}, {pipeline_mode = #tpu.pipeline_mode<synchronous>, transform_indices = @transform_1, window_bounds = array<i64: 63, 128>}, {pipeline_mode = #tpu.pipeline_mode<synchronous>, transform_indices = @transform_2, window_bounds = array<i64: 1, 128>}, {pipeline_mode = #tpu.pipeline_mode<synchronous>, transform_indices = @transform_3, window_bounds = array<i64: 128, 64>}, {pipeline_mode = #tpu.pipeline_mode<synchronous>, transform_indices = @transform_4, window_bounds = array<i64: 1, 64>}, {pipeline_mode = #tpu.pipeline_mode<synchronous>, transform_indices = @transform_5, window_bounds = array<i64: 64, 10>}, {pipeline_mode = #tpu.pipeline_mode<synchronous>, transform_indices = @transform_6, window_bounds = array<i64: 1, 10>}, {transform_indices = @transform_7, window_bounds = array<i64: 8, 10>}]} {
    %c0 = arith.constant 0 : index
    %c0_0 = arith.constant 0 : index
    %0 = vector.load %arg1[%c0, %c0_0] : memref<8x63xf32, #tpu.memory_space<vmem>>, vector<8x63xf32>
    %1 = arith.truncf %0 : vector<8x63xf32> to vector<8x63xbf16>
    %c0_1 = arith.constant 0 : index
    %c0_2 = arith.constant 0 : index
    %2 = vector.load %arg2[%c0_1, %c0_2] : memref<63x128xbf16, #tpu.memory_space<vmem>>, vector<63x128xbf16>
    %cst = arith.constant dense<0.000000e+00> : vector<8x128xf32>
    %3 = tpu.matmul %1, %2, %cst {dimension_numbers = #tpu.dot_dimension_numbers<[1], [0], [0], [1], [0, 0, 1, 1], [], []>} : vector<8x63xbf16>, vector<63x128xbf16>, vector<8x128xf32> -> vector<8x128xf32>
    %c0_3 = arith.constant 0 : index
    %c0_4 = arith.constant 0 : index
    %4 = vector.load %arg3[%c0_3, %c0_4] : memref<1x128xf32, #tpu.memory_space<vmem>>, vector<1x128xf32>
    %5 = vector.broadcast %4 : vector<1x128xf32> to vector<8x128xf32>
    %6 = arith.addf %3, %5 : vector<8x128xf32>
    %cst_5 = arith.constant 0.000000e+00 : f32
    %7 = vector.broadcast %cst_5 : f32 to vector<8x128xf32>
    %8 = arith.maximumf %6, %7 : vector<8x128xf32>
    %9 = arith.truncf %8 : vector<8x128xf32> to vector<8x128xbf16>
    %c0_6 = arith.constant 0 : index
    %c0_7 = arith.constant 0 : index
    %10 = vector.load %arg4[%c0_6, %c0_7] : memref<128x64xbf16, #tpu.memory_space<vmem>>, vector<128x64xbf16>
    %cst_8 = arith.constant dense<0.000000e+00> : vector<8x64xf32>
    %11 = tpu.matmul %9, %10, %cst_8 {dimension_numbers = #tpu.dot_dimension_numbers<[1], [0], [0], [1], [0, 0, 1, 1], [], []>} : vector<8x128xbf16>, vector<128x64xbf16>, vector<8x64xf32> -> vector<8x64xf32>
    %c0_9 = arith.constant 0 : index
    %c0_10 = arith.constant 0 : index
    %12 = vector.load %arg5[%c0_9, %c0_10] : memref<1x64xf32, #tpu.memory_space<vmem>>, vector<1x64xf32>
    %13 = vector.broadcast %12 : vector<1x64xf32> to vector<8x64xf32>
    %14 = arith.addf %11, %13 : vector<8x64xf32>
    %cst_11 = arith.constant 0.000000e+00 : f32
    %15 = vector.broadcast %cst_11 : f32 to vector<8x64xf32>
    %16 = arith.maximumf %14, %15 : vector<8x64xf32>
    %17 = arith.truncf %16 : vector<8x64xf32> to vector<8x64xbf16>
    %c0_12 = arith.constant 0 : index
    %c0_13 = arith.constant 0 : index
    %18 = vector.load %arg6[%c0_12, %c0_13] : memref<64x10xbf16, #tpu.memory_space<vmem>>, vector<64x10xbf16>
    %cst_14 = arith.constant dense<0.000000e+00> : vector<8x10xf32>
    %19 = tpu.matmul %17, %18, %cst_14 {dimension_numbers = #tpu.dot_dimension_numbers<[1], [0], [0], [1], [0, 0, 1, 1], [], []>} : vector<8x64xbf16>, vector<64x10xbf16>, vector<8x10xf32> -> vector<8x10xf32>
    %c0_15 = arith.constant 0 : index
    %c0_16 = arith.constant 0 : index
    %20 = vector.load %arg7[%c0_15, %c0_16] : memref<1x10xf32, #tpu.memory_space<vmem>>, vector<1x10xf32>
    %21 = vector.broadcast %20 : vector<1x10xf32> to vector<8x10xf32>
    %22 = arith.addf %19, %21 : vector<8x10xf32>
    %c0_17 = arith.constant 0 : index
    %c0_18 = arith.constant 0 : index
    %23 = vector.load %arg8[%c0_17, %c0_18] : memref<8x10xf32, #tpu.memory_space<vmem>>, vector<8x10xf32>
    tpu.vector_store %arg8[%c0_17, %c0_18], %22 {strides = array<i32>} : memref<8x10xf32, #tpu.memory_space<vmem>>, vector<8x10xf32>,
    return
  }
  func.func @transform_0(%arg0: i32) -> (i32, i32) {
    %c0_i32 = arith.constant 0 : i32
    %c0_i32_0 = arith.constant 0 : i32
    return %arg0, %c0_i32 : i32, i32
  }
  func.func @transform_1(%arg0: i32) -> (i32, i32) {
    %c0_i32 = arith.constant 0 : i32
    %c0_i32_0 = arith.constant 0 : i32
    %c0_i32_1 = arith.constant 0 : i32
    return %c0_i32, %c0_i32_0 : i32, i32
  }
  func.func @transform_2(%arg0: i32) -> (i32, i32) {
    %c0_i32 = arith.constant 0 : i32
    %c0_i32_0 = arith.constant 0 : i32
    %c0_i32_1 = arith.constant 0 : i32
    return %c0_i32, %c0_i32_0 : i32, i32
  }
  func.func @transform_3(%arg0: i32) -> (i32, i32) {
    %c0_i32 = arith.constant 0 : i32
    %c0_i32_0 = arith.constant 0 : i32
    %c0_i32_1 = arith.constant 0 : i32
    return %c0_i32, %c0_i32_0 : i32, i32
  }
  func.func @transform_4(%arg0: i32) -> (i32, i32) {
    %c0_i32 = arith.constant 0 : i32
    %c0_i32_0 = arith.constant 0 : i32
    %c0_i32_1 = arith.constant 0 : i32
    return %c0_i32, %c0_i32_0 : i32, i32
  }
  func.func @transform_5(%arg0: i32) -> (i32, i32) {
    %c0_i32 = arith.constant 0 : i32
    %c0_i32_0 = arith.constant 0 : i32
    %c0_i32_1 = arith.constant 0 : i32
    return %c0_i32, %c0_i32_0 : i32, i32
  }
  func.func @transform_6(%arg0: i32) -> (i32, i32) {
    %c0_i32 = arith.constant 0 : i32
    %c0_i32_0 = arith.constant 0 : i32
    %c0_i32_1 = arith.constant 0 : i32
    return %c0_i32, %c0_i32_0 : i32, i32
  }
  func.func @transform_7(%arg0: i32) -> (i32, i32) {
    %c0_i32 = arith.constant 0 : i32
    %c0_i32_0 = arith.constant 0 : i32
    return %arg0, %c0_i32 : i32, i32
  }
}

</mosaic_0001>

<llo_original>
// kernel: tpu_custom_call.1
$region0: #{tpu_custom_call.1}
  #allocation0 [shape = 'u32[]', space=smem, size = 0x4, offset = 0x4, fixed_abs, tag = 'smem constant byte address 0x4 - core index']
  #allocation1 [shape = 'u32[144,128]{1,0:T(1,128)}', space=vmem, size = 0x12000, scoped, tag = 'internal scratch']
  %s0 = inlined_call_operand.vmem [shape: f32[8,63], index: 0, kind: input, shape index: {}]
  %s1 = inlined_call_operand.vmem [shape: bf16[63,128], index: 1, kind: input, shape index: {}]
  %s2 = inlined_call_operand.vmem [shape: f32[1,128], index: 2, kind: input, shape index: {}]
  %s3 = inlined_call_operand.vmem [shape: bf16[128,64], index: 3, kind: input, shape index: {}]
  %s4 = inlined_call_operand.vmem [shape: f32[1,64], index: 4, kind: input, shape index: {}]
  %s5 = inlined_call_operand.vmem [shape: bf16[64,10], index: 5, kind: input, shape index: {}]
  %s6 = inlined_call_operand.vmem [shape: f32[1,10], index: 6, kind: input, shape index: {}]
  %s7 = inlined_call_operand.hbm [shape: f32[8,10], index: 7, kind: output, shape index: {}]
  %s8 = sld [smem:[#allocation0]]
  $region38: #{tpu_custom_call.1} parent=0
    _
  %s10 = ssub.s32 1, %s8
  %s11 = scalar_select 0, %s10, %s8
  $region1: #{tpu_custom_call.1} parent=0
    #allocation2 [shape = 'u8[4096]{0}', space=vmem, size = 0x1000, scoped, tag = 'output window, operand 0, single buffered']
    #allocation3 [shape = 's32[1]{0}', space=sflag, size = 0x4, scoped, tag = 'scoped memory for tpu_custom_call.1']
    %12 = vsyncpa [#allocation3], 0
    // Predicated region
    $region2: #{tpu_custom_call.1} parent=1 // pred_check
      _
    $region3: #{tpu_custom_call.1} parent=1 // pred_check_branch
      %14 = sbr.rel (0) target = $region5
    $region4: #{tpu_custom_call.1} parent=1 // pred_region
      _
    $region5: #{tpu_custom_call.1} parent=1 // pred_fallthru
      _
    // Predicated region
    $region6: #{tpu_custom_call.1} parent=1 // pred_check
      _
    $region7: #{tpu_custom_call.1} parent=1 // pred_check_branch
      %16 = sbr.rel (0) target = $region9
    $region8: #{tpu_custom_call.1} parent=1 // pred_region
      _
    $region9: #{tpu_custom_call.1} parent=1 // pred_fallthru
      _
    // Predicated region
    $region10: #{tpu_custom_call.1} parent=1 // pred_check
      _
    $region11: #{tpu_custom_call.1} parent=1 // pred_check_branch
      %18 = sbr.rel (0) target = $region13
    $region12: #{tpu_custom_call.1} parent=1 // pred_region
      _
    $region13: #{tpu_custom_call.1} parent=1 // pred_fallthru
      _
    // Predicated region
    $region14: #{tpu_custom_call.1} parent=1 // pred_check
      _
    $region15: #{tpu_custom_call.1} parent=1 // pred_check_branch
      %20 = sbr.rel (0) target = $region17
    $region16: #{tpu_custom_call.1} parent=1 // pred_region
      _
    $region17: #{tpu_custom_call.1} parent=1 // pred_fallthru
      _
    // Predicated region
    $region18: #{tpu_custom_call.1} parent=1 // pred_check
      _
    $region19: #{tpu_custom_call.1} parent=1 // pred_check_branch
      %22 = sbr.rel (0) target = $region21
    $region20: #{tpu_custom_call.1} parent=1 // pred_region
      _
    $region21: #{tpu_custom_call.1} parent=1 // pred_fallthru
      _
    // Predicated region
    $region22: #{tpu_custom_call.1} parent=1 // pred_check
      _
    $region23: #{tpu_custom_call.1} parent=1 // pred_check_branch
      %24 = sbr.rel (0) target = $region25
    $region24: #{tpu_custom_call.1} parent=1 // pred_region
      _
    $region25: #{tpu_custom_call.1} parent=1 // pred_fallthru
      _
    // Predicated region
    $region26: #{tpu_custom_call.1} parent=1 // pred_check
      _
    $region27: #{tpu_custom_call.1} parent=1 // pred_check_branch
      %26 = sbr.rel (0) target = $region29
    $region28: #{tpu_custom_call.1} parent=1 // pred_region
      _
    $region29: #{tpu_custom_call.1} parent=1 // pred_fallthru
      _
    %v28 = vld [vmem:[%s0] sm:$0xff]
    %v29 = vpack.c.bf16 %v28, %v28
    %v30 = vld [vmem:[%s1] sm:$0xf]
    %v31 = vld [vmem:[%s1 + $0x4] sm:$0xf]
    %v32 = vld [vmem:[%s1 + $0x8] sm:$0xf]
    %v33 = vld [vmem:[%s1 + $0xc] sm:$0xf]
    %v34 = vld [vmem:[%s1 + $0x10] sm:$0xf]
    %v35 = vld [vmem:[%s1 + $0x14] sm:$0xf]
    %v36 = vld [vmem:[%s1 + $0x18] sm:$0xf]
    %v37 = vld [vmem:[%s1 + $0x1c] sm:$0xf]
    %v38 = vld [vmem:[%s2] sm:$0x1]
    %v40 = vlaneseq
    %v41 = vshrl.u32 %v40, 7
    %v42 = vsub.s32 0, %v41
    %v43 = vrot.slane %v38, %v42
    %v53 = vunpack.c.l.b16 %v30
    %v54 = vunpack.c.l.b16 %v31
    %v55 = vunpack.c.l.b16 %v32
    %v56 = vunpack.c.l.b16 %v33
    %v57 = vunpack.c.l.b16 %v34
    %v58 = vunpack.c.l.b16 %v35
    %v59 = vunpack.c.l.b16 %v36
    %v60 = vunpack.c.l.b16 %v37
    %v61 = vpack.c.b16 %v54, %v53
    %v62 = vpack.c.b16 %v56, %v55
    %v63 = vpack.c.b16 %v58, %v57
    %v64 = vpack.c.b16 %v60, %v59
    %vm68 = vcmask 515072
    %v70 = vsel %vm68, %v29, 0
    %vm72 = vcmask 1046528
    %vm73 = vcmask 1047552
    %v74 = vsel %vm72, 4294967295, 65535
    %v75 = vsel %vm73, %v74, 0
    %v77 = vand.u32 %v64, %v75
    %79 = vmatprep.subr.bf16.mxu0 0
    %80 = vmatpush1.bf16.msra.mxu0 %v61
    %81 = vmatprep.subr.bf16.mxu0 0
    %82 = vmatpush1.bf16.msra.mxu0 %v62
    %83 = vmatprep.subr.bf16.mxu0 0
    %84 = vmatpush1.bf16.msra.mxu0 %v63
    %85 = vmatprep.subr.bf16.mxu0 0
    %86 = vmatpush1.bf16.msra.mxu0 %v77
    %87 = vmatprep.subr.bf16.mxu0 0
    %88 = vmatpush1.bf16.msra.mxu0 0
    %89 = vmatprep.subr.bf16.mxu0 0
    %90 = vmatpush1.bf16.msra.mxu0 0
    %91 = vmatprep.subr.bf16.mxu0 0
    %92 = vmatpush1.bf16.msra.mxu0 0
    %93 = vmatprep.subr.bf16.mxu0 0
    %94 = vmatpush1.bf16.msra.mxu0 0
    %95 = vmatprep.subr.bf16.mxu0 0
    %96 = vmatpush1.bf16.msra.mxu0 0
    %97 = vmatprep.subr.bf16.mxu0 0
    %98 = vmatpush1.bf16.msra.mxu0 0
    %99 = vmatprep.subr.bf16.mxu0 0
    %100 = vmatpush1.bf16.msra.mxu0 0
    %101 = vmatprep.subr.bf16.mxu0 0
    %102 = vmatpush1.bf16.msra.mxu0 0
    %103 = vmatprep.subr.bf16.mxu0 0
    %104 = vmatpush1.bf16.msra.mxu0 0
    %105 = vmatprep.subr.bf16.mxu0 0
    %106 = vmatpush1.bf16.msra.mxu0 0
    %107 = vmatprep.subr.bf16.mxu0 0
    %108 = vmatpush1.bf16.msra.mxu0 0
    %109 = vmatprep.subr.bf16.mxu0 0
    %110 = vmatpush1.bf16.msra.mxu0 0
    %111 = vmatprep.mubr.bf16.mxu0 0
    %112 = vmatmul.mubr.bf16.gmra.mrb[0].mxu0 %v70
    %v113 = vpop.f32.mrb[0].mxu0
    %v114 = vadd.f32 %v43, %v113
    %v115 = vpop.f32.mrb[0].mxu0
    %v116 = vpop.f32.mrb[0].mxu0
    %v117 = vpop.f32.mrb[0].mxu0
    %118 = vdwg.mxu0
    %v119 = vmax.f32 %v114, 0.0
    %v120 = vpack.c.bf16 %v119, %v119
    %v121 = vld [vmem:[%s3] sm:$0xf]
    %v122 = vld [vmem:[%s3 + $0x4] sm:$0xf]
    %v123 = vld [vmem:[%s3 + $0x8] sm:$0xf]
    %v124 = vld [vmem:[%s3 + $0xc] sm:$0xf]
    %v125 = vld [vmem:[%s3 + $0x10] sm:$0xf]
    %v126 = vld [vmem:[%s3 + $0x14] sm:$0xf]
    %v127 = vld [vmem:[%s3 + $0x18] sm:$0xf]
    %v128 = vld [vmem:[%s3 + $0x1c] sm:$0xf]
    %v129 = vld [vmem:[%s3 + $0x20] sm:$0xf]
    %v130 = vld [vmem:[%s3 + $0x24] sm:$0xf]
    %v131 = vld [vmem:[%s3 + $0x28] sm:$0xf]
    %v132 = vld [vmem:[%s3 + $0x2c] sm:$0xf]
    %v133 = vld [vmem:[%s3 + $0x30] sm:$0xf]
    %v134 = vld [vmem:[%s3 + $0x34] sm:$0xf]
    %v135 = vld [vmem:[%s3 + $0x38] sm:$0xf]
    %v136 = vld [vmem:[%s3 + $0x3c] sm:$0xf]
    %v137 = vld [vmem:[%s4] sm:$0x1]
    %v139 = vlaneseq
    %v140 = vshrl.u32 %v139, 7
    %v141 = vsub.s32 0, %v140
    %v142 = vrot.slane %v137, %v141
    %v160 = vunpack.c.l.b16 %v121
    %v161 = vunpack.c.l.b16 %v122
    %v162 = vunpack.c.l.b16 %v123
    %v163 = vunpack.c.l.b16 %v124
    %v164 = vunpack.c.l.b16 %v125
    %v165 = vunpack.c.l.b16 %v126
    %v166 = vunpack.c.l.b16 %v127
    %v167 = vunpack.c.l.b16 %v128
    %v168 = vunpack.c.l.b16 %v129
    %v169 = vunpack.c.l.b16 %v130
    %v170 = vunpack.c.l.b16 %v131
    %v171 = vunpack.c.l.b16 %v132
    %v172 = vunpack.c.l.b16 %v133
    %v173 = vunpack.c.l.b16 %v134
    %v174 = vunpack.c.l.b16 %v135
    %v175 = vunpack.c.l.b16 %v136
    %v176 = vpack.c.b16 %v161, %v160
    %v177 = vpack.c.b16 %v163, %v162
    %v178 = vpack.c.b16 %v165, %v164
    %v179 = vpack.c.b16 %v167, %v166
    %v180 = vpack.c.b16 %v169, %v168
    %v181 = vpack.c.b16 %v171, %v170
    %v182 = vpack.c.b16 %v173, %v172
    %v183 = vpack.c.b16 %v175, %v174
    %192 = vmatprep.subr.bf16.mxu0 0
    %193 = vmatpush1.bf16.msra.mxu0 %v176
    %194 = vmatprep.subr.bf16.mxu0 0
    %195 = vmatpush1.bf16.msra.mxu0 %v177
    %196 = vmatprep.subr.bf16.mxu0 0
    %197 = vmatpush1.bf16.msra.mxu0 %v178
    %198 = vmatprep.subr.bf16.mxu0 0
    %199 = vmatpush1.bf16.msra.mxu0 %v179
    %200 = vmatprep.subr.bf16.mxu0 0
    %201 = vmatpush1.bf16.msra.mxu0 %v180
    %202 = vmatprep.subr.bf16.mxu0 0
    %203 = vmatpush1.bf16.msra.mxu0 %v181
    %204 = vmatprep.subr.bf16.mxu0 0
    %205 = vmatpush1.bf16.msra.mxu0 %v182
    %206 = vmatprep.subr.bf16.mxu0 0
    %207 = vmatpush1.bf16.msra.mxu0 %v183
    %208 = vmatprep.subr.bf16.mxu0 0
    %209 = vmatpush1.bf16.msra.mxu0 0
    %210 = vmatprep.subr.bf16.mxu0 0
    %211 = vmatpush1.bf16.msra.mxu0 0
    %212 = vmatprep.subr.bf16.mxu0 0
    %213 = vmatpush1.bf16.msra.mxu0 0
    %214 = vmatprep.subr.bf16.mxu0 0
    %215 = vmatpush1.bf16.msra.mxu0 0
    %216 = vmatprep.subr.bf16.mxu0 0
    %217 = vmatpush1.bf16.msra.mxu0 0
    %218 = vmatprep.subr.bf16.mxu0 0
    %219 = vmatpush1.bf16.msra.mxu0 0
    %220 = vmatprep.subr.bf16.mxu0 0
    %221 = vmatpush1.bf16.msra.mxu0 0
    %222 = vmatprep.subr.bf16.mxu0 0
    %223 = vmatpush1.bf16.msra.mxu0 0
    %224 = vmatprep.mubr.bf16.mxu0 0
    %225 = vmatmul.mubr.bf16.gmra.mrb[0].mxu0 %v120
    %v226 = vpop.f32.mrb[0].mxu0
    %v227 = vadd.f32 %v142, %v226
    %v228 = vpop.f32.mrb[0].mxu0
    %v229 = vpop.f32.mrb[0].mxu0
    %v230 = vpop.f32.mrb[0].mxu0
    %231 = vdwg.mxu0
    %v232 = vmax.f32 %v227, 0.0
    %v233 = vpack.c.bf16 %v232, %v232
    %v234 = vld [vmem:[%s5] sm:$0xf]
    %v235 = vld [vmem:[%s5 + $0x4] sm:$0xf]
    %v236 = vld [vmem:[%s5 + $0x8] sm:$0xf]
    %v237 = vld [vmem:[%s5 + $0xc] sm:$0xf]
    %v238 = vld [vmem:[%s5 + $0x10] sm:$0xf]
    %v239 = vld [vmem:[%s5 + $0x14] sm:$0xf]
    %v240 = vld [vmem:[%s5 + $0x18] sm:$0xf]
    %v241 = vld [vmem:[%s5 + $0x1c] sm:$0xf]
    %v242 = vld [vmem:[%s6] sm:$0x1]
    %v244 = vlaneseq
    %v245 = vshrl.u32 %v244, 7
    %v246 = vsub.s32 0, %v245
    %v247 = vrot.slane %v242, %v246
    %v257 = vunpack.c.l.b16 %v234
    %v258 = vunpack.c.l.b16 %v235
    %v259 = vunpack.c.l.b16 %v236
    %v260 = vunpack.c.l.b16 %v237
    %v261 = vunpack.c.l.b16 %v238
    %v262 = vunpack.c.l.b16 %v239
    %v263 = vunpack.c.l.b16 %v240
    %v264 = vunpack.c.l.b16 %v241
    %v265 = vpack.c.b16 %v258, %v257
    %v266 = vpack.c.b16 %v260, %v259
    %v267 = vpack.c.b16 %v262, %v261
    %v268 = vpack.c.b16 %v264, %v263
    %vm273 = vcmask 523264
    %v275 = vsel %vm273, %v233, 0
    %277 = vmatprep.subr.bf16.mxu0 0
    %278 = vmatpush1.bf16.msra.mxu0 %v265
    %279 = vmatprep.subr.bf16.mxu0 0
    %280 = vmatpush1.bf16.msra.mxu0 %v266
    %281 = vmatprep.subr.bf16.mxu0 0
    %282 = vmatpush1.bf16.msra.mxu0 %v267
    %283 = vmatprep.subr.bf16.mxu0 0
    %284 = vmatpush1.bf16.msra.mxu0 %v268
    %285 = vmatprep.subr.bf16.mxu0 0
    %286 = vmatpush1.bf16.msra.mxu0 0
    %287 = vmatprep.subr.bf16.mxu0 0
    %288 = vmatpush1.bf16.msra.mxu0 0
    %289 = vmatprep.subr.bf16.mxu0 0
    %290 = vmatpush1.bf16.msra.mxu0 0
    %291 = vmatprep.subr.bf16.mxu0 0
    %292 = vmatpush1.bf16.msra.mxu0 0
    %293 = vmatprep.subr.bf16.mxu0 0
    %294 = vmatpush1.bf16.msra.mxu0 0
    %295 = vmatprep.subr.bf16.mxu0 0
    %296 = vmatpush1.bf16.msra.mxu0 0
    %297 = vmatprep.subr.bf16.mxu0 0
    %298 = vmatpush1.bf16.msra.mxu0 0
    %299 = vmatprep.subr.bf16.mxu0 0
    %300 = vmatpush1.bf16.msra.mxu0 0
    %301 = vmatprep.subr.bf16.mxu0 0
    %302 = vmatpush1.bf16.msra.mxu0 0
    %303 = vmatprep.subr.bf16.mxu0 0
    %304 = vmatpush1.bf16.msra.mxu0 0
    %305 = vmatprep.subr.bf16.mxu0 0
    %306 = vmatpush1.bf16.msra.mxu0 0
    %307 = vmatprep.subr.bf16.mxu0 0
    %308 = vmatpush1.bf16.msra.mxu0 0
    %309 = vmatprep.mubr.bf16.mxu0 0
    %310 = vmatmul.mubr.bf16.gmra.mrb[0].mxu0 %v275
    %v311 = vpop.f32.mrb[0].mxu0
    %v312 = vadd.f32 %v247, %v311
    %v313 = vpop.f32.mrb[0].mxu0
    %v314 = vpop.f32.mrb[0].mxu0
    %v315 = vpop.f32.mrb[0].mxu0
    %316 = vdwg.mxu0
    %vm317 = vcmask 80896
    %318 = vst.msk [vmem:[#allocation2] sm:$0xff] %vm317, %v312
    // Predicated region
    $region30: #{tpu_custom_call.1} parent=1 // pred_check
      _
    $region31: #{tpu_custom_call.1} parent=1 // pred_check_branch
      %320 = sbr.rel (0) target = $region33
    $region32: #{tpu_custom_call.1} parent=1 // pred_region
      %s322 = ssub.s32 128, 128
      %323 = vsyncadd [#allocation3], %s322
      %s325 = sshll.u32 [#allocation2], 4
      %s326 = int_to_ptr.vmem [resolvable:$true] %s325
      %328 = dma.vmem_to_hbm [thread:$0]  %s326, 128, %s7, [#allocation3]
    $region33: #{tpu_custom_call.1} parent=1 // pred_fallthru
      _
    // Predicated region
    $region34: #{tpu_custom_call.1} parent=1 // pred_check
      _
    $region35: #{tpu_custom_call.1} parent=1 // pred_check_branch
      %330 = sbr.rel (0) target = $region37
    $region36: #{tpu_custom_call.1} parent=1 // pred_region
      %331 = dma.done [#allocation3], 128
    $region37: #{tpu_custom_call.1} parent=1 // pred_fallthru
      _
    %332 = vsyncpa [#allocation3], 1

</llo_original>
